<compile_context>
chip_gen: v7x
topology: tpu7x:2x2x1
jax: 0.10.0
libtpu: 0.0.40
codegen_flags: <defaults>
</compile_context>

<pallas_src>
import functools
import math

import jax
import jax.numpy as jnp
from jax import lax
from jax.experimental import pallas as pl
from jax.experimental.pallas import tpu as pltpu


def _round_up(x, m):
    return ((x + m - 1) // m) * m


def _vmem_capacity_bytes(default=64 * 1024 * 1024):
    """Physical VMEM of the local TPU; 64 MiB fallback covers v7x (the smallest)."""
    try:
        info = pltpu.get_tpu_info()
        cap = int(getattr(info, "vmem_capacity_bytes", 0) or 0)
        if cap > 0:
            return cap
    except Exception:
        pass
    return default


def compute_quant_params(weight, *, bits=8):
    """Per-tensor MinMax ('tensor' method) scale / zero_point.

    Hoisted out of the forward: the reference module recomputes these only every
    `update_step` iterations, so do the full-table min/max once per weight update.
    # TODO(synk): fairseq default method='histogram' (torch HistogramObserver) is not
    # reproduced; 'tensor' (MinMaxObserver, per-tensor affine) semantics are used.
    """
    qmin, qmax = 0.0, float(2 ** bits - 1)
    w_min = jnp.minimum(jnp.min(weight), 0.0)
    w_max = jnp.maximum(jnp.max(weight), 0.0)
    eps = jnp.asarray(jnp.finfo(jnp.float32).eps, jnp.float32)
    scale = jnp.maximum((w_max - w_min) / (qmax - qmin), eps)
    zero_point = jnp.clip(qmin - jnp.round(w_min / scale), qmin, qmax)
    return scale.astype(jnp.float32), zero_point.astype(jnp.float32)


def _fake_quant(w, qp_ref, qmax):
    """emulate_int + clamp.  qp_ref (SMEM) = [inv_scale, scale, zp, clamp_lo, clamp_hi].

    Eval mode: p = 1 -> the Bernoulli(1-p) mask is all zeros -> keep the full noise.
    # TODO(synk): training-time Bernoulli quant-noise mask (p < 1) not emulated.
    """
    inv_scale = qp_ref[0]
    scale = qp_ref[1]
    zp = qp_ref[2]
    clamp_lo = qp_ref[3]
    clamp_hi = qp_ref[4]
    wq = (jnp.clip(jnp.round(w * inv_scale + zp), 0.0, qmax) - zp) * scale
    noise = wq - w
    return jnp.clip(w, clamp_lo, clamp_hi) + noise


# --------------------------------------------------------------------------------------
# Path A: table resident in VMEM, in-VMEM row gather (small / medium vocabularies).
# --------------------------------------------------------------------------------------
def _qembed_vmem_kernel(ids_ref, qp_ref, w_ref, out_ref, gbuf, *, bits, t_tile):
    # ids_ref : SMEM (T_total,) int32 flattened token ids (scalar prefetch)
    # qp_ref  : SMEM (5,) f32 quant params
    # w_ref   : VMEM (V, D) full table, resident across all grid steps (constant index)
    # out_ref : VMEM (t_tile, D) output tile
    # gbuf    : VMEM (t_tile, D) gather scratch
    base = pl.program_id(0) * t_tile

    def gather_row(r, carry):
        row = ids_ref[base + r]
        gbuf[pl.ds(r, 1), :] = w_ref[pl.ds(row, 1), :]
        return carry

    lax.fori_loop(0, t_tile, gather_row, None, unroll=8)

    w = gbuf[...].astype(jnp.float32)
    out_ref[...] = _fake_quant(w, qp_ref, float(2 ** bits - 1)).astype(out_ref.dtype)


# --------------------------------------------------------------------------------------
# Path B: weight in HBM, per-row DMA gather, double-buffered across grid steps,
#         aggregated semaphore waits (large vocabularies).
# --------------------------------------------------------------------------------------
def _qembed_hbm_kernel(ids_ref, qp_ref, w_hbm, out_ref, row_buf, sem,
                       *, bits, t_tile, n_sems):
    # ids_ref : SMEM (T_total,) int32 flattened token ids (scalar prefetch)
    # qp_ref  : SMEM (5,) f32 quant params
    # w_hbm   : (V, D) weight left in HBM (memory_space=pl.ANY)
    # out_ref : VMEM (t_tile, D) output tile
    # row_buf : VMEM (2 * t_tile, D) double-buffered gather scratch
    # sem     : DMA semaphores (2 * n_sems,), round-robin per buffer slot
    i = pl.program_id(0)
    nt = pl.num_programs(0)
    rows_per_sem = t_tile // n_sems

    def issue(tile_idx, slot):
        base = tile_idx * t_tile
        buf0 = slot * t_tile
        sem0 = slot * n_sems

        def body(r, carry):
            row = ids_ref[base + r]          # SMEM id read happens before any wait
            pltpu.make_async_copy(
                w_hbm.at[row],
                row_buf.at[buf0 + r],
                sem.at[sem0 + (r % n_sems)],
            ).start()
            return carry

        # Partial unroll gives the LLO scheduler visibility to co-issue address math
        # with the DMA descriptor pushes.
        lax.fori_loop(0, t_tile, body, None, unroll=8)

    # Prologue: gather the first tile.
    @pl.when(i == 0)
    def _():
        issue(0, 0)

    # Software pipeline: kick off the gather for tile i+1 (its ids are already in SMEM)
    # before waiting on / computing tile i.
    @pl.when(i + 1 < nt)
    def _():
        issue(i + 1, (i + 1) % 2)

    slot = i % 2
    buf0 = pl.multiple_of(slot * t_tile, 8)

    # Aggregated waits: each semaphore was signaled by exactly rows_per_sem equal-sized
    # row copies, so one wait whose descriptor covers rows_per_sem rows drains it.
    for s in range(n_sems):
        pltpu.make_async_copy(
            w_hbm.at[pl.ds(0, rows_per_sem)],
            row_buf.at[pl.ds(buf0, rows_per_sem)],
            sem.at[slot * n_sems + s],
        ).wait()

    w = row_buf[pl.ds(buf0, t_tile), :].astype(jnp.float32)
    out_ref[...] = _fake_quant(w, qp_ref, float(2 ** bits - 1)).astype(out_ref.dtype)


# --------------------------------------------------------------------------------------
# Wrapper
# --------------------------------------------------------------------------------------
def int_embedding_forward(token_ids, weight, scale=None, zero_point=None, *,
                          bits=8, t_tile=256, n_sems=16, force_hbm_gather=False):
    """Quantized embedding forward. token_ids: (...,) int32, weight: (V, D) float."""
    orig_shape = token_ids.shape
    V, D = weight.shape
    T = int(token_ids.size)

    if scale is None or zero_point is None:
        scale, zero_point = compute_quant_params(weight, bits=bits)

    qmax = float(2 ** bits - 1)
    scale = scale.astype(jnp.float32)
    zero_point = zero_point.astype(jnp.float32)
    inv_scale = 1.0 / scale
    clamp_lo = -scale * zero_point
    clamp_hi = scale * (qmax - zero_point)
    qparams = jnp.stack([inv_scale, scale, zero_point, clamp_lo, clamp_hi]).astype(jnp.float32)

    # Lane-dense output: pad the embedding dim to a multiple of 128 so the (t_tile, D)
    # output block stores with full-width vst instead of masked vst.msk.
    D_pad = _round_up(D, 128)
    if D_pad != D:
        weight = jnp.pad(weight, ((0, 0), (0, D_pad - D)))
    itemsize = jnp.dtype(weight.dtype).itemsize

    # Clamp out-of-range ids (an id >= V would drive a row gather out of bounds).
    flat_ids = jnp.clip(token_ids.reshape(T).astype(jnp.int32), 0, V - 1)

    # ---- Path selection & per-generation tile sizing ----
    vmem_cap = _vmem_capacity_bytes()
    table_bytes = V * D_pad * itemsize
    # The resident-table input block may be double-buffered by the pipeline: require
    # 2x table to fit in half of physical VMEM (threshold automatically halves on v7x).
    use_vmem_table = (not force_hbm_gather) and (2 * table_bytes <= vmem_cap // 2)

    reserve = 8 << 20
    if use_vmem_table:
        avail = max(vmem_cap - 2 * table_bytes - reserve, 1 << 20)
        per_row = 3 * D_pad * itemsize          # gather scratch + 2x out block
    else:
        avail = max(vmem_cap - reserve, 1 << 20)
        per_row = 6 * D_pad * itemsize          # 2x row_buf + 2x out block + slack
    max_rows = max(8, (avail // per_row) // 8 * 8)

    t_tile = max(8, min(_round_up(t_tile, 8), max_rows, _round_up(T, 8)))

    # Keep both v7x TensorCores busy on the ("parallel",) resident-table path.
    if use_vmem_table and t_tile >= T and T >= 16:
        t_tile = _round_up(-(-T // 2), 8)

    # Prefer a t_tile dividing T exactly (no padded tail tile, no out[:T] slice copy).
    if T % t_tile != 0:
        for cand in range(t_tile - 8, max(8, t_tile // 4) - 1, -8):
            if cand > 0 and T % cand == 0:
                t_tile = cand
                break

    num_tiles = -(-T // t_tile)
    t_total = num_tiles * t_tile
    if t_total != T:
        flat_ids = jnp.pad(flat_ids, (0, t_total - T))   # padded slots gather row 0

    out_shape = jax.ShapeDtypeStruct((t_total, D_pad), weight.dtype)

    if use_vmem_table:
        kernel = functools.partial(_qembed_vmem_kernel, bits=bits, t_tile=t_tile)
        grid_spec = pltpu.PrefetchScalarGridSpec(
            num_scalar_prefetch=1,                                   # flat_ids -> SMEM
            grid=(num_tiles,),
            in_specs=[
                pl.BlockSpec(memory_space=pltpu.MemorySpace.SMEM),   # qparams
                pl.BlockSpec((V, D_pad), lambda i, ids: (0, 0)),     # table resident in VMEM
            ],
            out_specs=pl.BlockSpec((t_tile, D_pad), lambda i, ids: (i, 0)),
            scratch_shapes=[pltpu.VMEM((t_tile, D_pad), weight.dtype)],
        )
        dim_sem = ("parallel",)       # stateless per tile -> megacore-safe
        needed = 2 * table_bytes + 3 * t_tile * D_pad * itemsize
    else:
        n_sems = max(1, math.gcd(t_tile, max(1, int(n_sems))))
        kernel = functools.partial(_qembed_hbm_kernel, bits=bits,
                                   t_tile=t_tile, n_sems=n_sems)
        grid_spec = pltpu.PrefetchScalarGridSpec(
            num_scalar_prefetch=1,                                   # flat_ids -> SMEM
            grid=(num_tiles,),
            in_specs=[
                pl.BlockSpec(memory_space=pltpu.MemorySpace.SMEM),   # qparams
                pl.BlockSpec(memory_space=pl.ANY),                   # weight stays in HBM
            ],
            out_specs=pl.BlockSpec((t_tile, D_pad), lambda i, ids: (i, 0)),
            scratch_shapes=[
                pltpu.VMEM((2 * t_tile, D_pad), weight.dtype),       # double-buffered rows
                pltpu.SemaphoreType.DMA((2 * n_sems,)),              # per-slot row-gather sems
            ],
        )
        # Cross-step double-buffering requires sequential grid execution (a "parallel"
        # axis would skip the prologue on v7x's second core and deadlock its first wait).
        dim_sem = ("arbitrary",)
        needed = 6 * t_tile * D_pad * itemsize

    vmem_limit = int(min(vmem_cap, max(needed + (8 << 20), 32 << 20)))

    out = pl.pallas_call(
        kernel,
        grid_spec=grid_spec,
        out_shape=out_shape,
        compiler_params=pltpu.CompilerParams(
            dimension_semantics=dim_sem,
            vmem_limit_bytes=vmem_limit,
        ),
    )(flat_ids, qparams, weight)

    if t_total != T:
        out = out[:T]
    if D_pad != D:
        out = out[:, :D]
    return out.reshape(*orig_shape, D)


def _reference(token_ids, weight, *, bits=8):
    """Plain-JAX reference of the same eval-mode forward."""
    qmin, qmax = 0.0, float(2 ** bits - 1)
    w_min = jnp.minimum(jnp.min(weight), 0.0)
    w_max = jnp.maximum(jnp.max(weight), 0.0)
    eps = jnp.asarray(jnp.finfo(jnp.float32).eps, jnp.float32)
    scale = jnp.maximum((w_max - w_min) / (qmax - qmin), eps)
    zp = jnp.clip(qmin - jnp.round(w_min / scale), qmin, qmax)
    wq = (jnp.clip(jnp.round(weight / scale + zp), 0.0, qmax) - zp) * scale
    noise = wq - weight
    w_used = jnp.clip(weight, -scale * zp, scale * (qmax - zp)) + noise
    return w_used[token_ids]


if __name__ == "__main__":
    key = jax.random.PRNGKey(0)
    k_w, k_ids = jax.random.split(key)

    num_embeddings, embedding_dim = 64, 128   # nn.Embedding(num_embeddings, embedding_dim)
    B, S = 2, 8                               # token id batch

    # reset_parameters(): nn.init.normal_(weight)  (padding_idx=None)
    # TODO(synk): padding_idx / max_norm / scale_grad_by_freq / sparse paths not emulated.
    weight = jax.random.normal(k_w, (num_embeddings, embedding_dim), dtype=jnp.float32)
    token_ids = jax.random.randint(k_ids, (B, S), 0, num_embeddings, dtype=jnp.int32)

    # Hoisted once-per-weight-update quantization params (update_step semantics).
    scale, zero_point = compute_quant_params(weight, bits=8)
    ref = _reference(token_ids, weight, bits=8)

    # Path A: table resident in VMEM (auto-selected for this small table).
    out = int_embedding_forward(token_ids, weight, scale, zero_point, bits=8)
    out = jax.block_until_ready(out)
    assert out.shape == (B, S, embedding_dim)
    assert jnp.allclose(out, ref, atol=1e-5, rtol=1e-5)

    # Path B: HBM row-gather with double-buffered DMAs + aggregated waits
    # (forced here to exercise the large-vocabulary path on the same inputs).
    out_hbm = int_embedding_forward(token_ids, weight, scale, zero_point, bits=8,
                                    t_tile=8, force_hbm_gather=True)
    out_hbm = jax.block_until_ready(out_hbm)
    assert out_hbm.shape == (B, S, embedding_dim)
    assert jnp.allclose(out_hbm, ref, atol=1e-5, rtol=1e-5)

    print("KERNEL_OK")
</pallas_src>

<mosaic_0001>
module attributes {stable_mosaic.version = 11 : i64} {
  func.func @_qembed_vmem_kernel(%arg0: i32, %arg1: memref<16xi32, #tpu.memory_space<smem>>, %arg2: memref<5xf32, #tpu.memory_space<smem>>, %arg3: memref<64x128xf32, #tpu.memory_space<vmem>>, %arg4: memref<8x128xf32, #tpu.memory_space<vmem>>, %arg5: memref<8x128xf32, #tpu.memory_space<vmem>>) attributes {dimension_semantics = [#tpu.dimension_semantics<parallel>], iteration_bounds = array<i64: 2>, scalar_prefetch = 1 : i64, scratch_operands = 1 : i64, tpu.core_type = #tpu.core_type<tc>, window_params = [{transform_indices = @transform_0, window_bounds = array<i64: 5>}, {pipeline_mode = #tpu.pipeline_mode<synchronous>, transform_indices = @transform_1, window_bounds = array<i64: 64, 128>}, {transform_indices = @transform_2, window_bounds = array<i64: 8, 128>}]} {
    %c8_i32 = arith.constant 8 : i32
    %0 = arith.muli %arg0, %c8_i32 : i32
    %c0_i32 = arith.constant 0 : i32
    %1 = arith.addi %0, %c0_i32 : i32
    %2 = arith.index_cast %1 : i32 to index
    %3 = memref.load %arg1[%2] : memref<16xi32, #tpu.memory_space<smem>>
    %4 = arith.index_cast %3 : i32 to index
    %c0 = arith.constant 0 : index
    %5 = vector.load %arg3[%4, %c0] : memref<64x128xf32, #tpu.memory_space<vmem>>, vector<1x128xf32>
    %6 = arith.index_cast %c0_i32 : i32 to index
    %c0_0 = arith.constant 0 : index
    %7 = vector.load %arg5[%6, %c0_0] : memref<8x128xf32, #tpu.memory_space<vmem>>, vector<1x128xf32>
    tpu.vector_store %arg5[%6, %c0_0], %5 {strides = array<i32>} : memref<8x128xf32, #tpu.memory_space<vmem>>, vector<1x128xf32>,
    %c1_i32 = arith.constant 1 : i32
    %8 = arith.addi %0, %c1_i32 : i32
    %9 = arith.index_cast %8 : i32 to index
    %10 = memref.load %arg1[%9] : memref<16xi32, #tpu.memory_space<smem>>
    %11 = arith.index_cast %10 : i32 to index
    %c0_1 = arith.constant 0 : index
    %12 = vector.load %arg3[%11, %c0_1] : memref<64x128xf32, #tpu.memory_space<vmem>>, vector<1x128xf32>
    %13 = arith.index_cast %c1_i32 : i32 to index
    %c0_2 = arith.constant 0 : index
    %14 = vector.load %arg5[%13, %c0_2] : memref<8x128xf32, #tpu.memory_space<vmem>>, vector<1x128xf32>
    tpu.vector_store %arg5[%13, %c0_2], %12 {strides = array<i32>} : memref<8x128xf32, #tpu.memory_space<vmem>>, vector<1x128xf32>,
    %c2_i32 = arith.constant 2 : i32
    %15 = arith.addi %0, %c2_i32 : i32
    %16 = arith.index_cast %15 : i32 to index
    %17 = memref.load %arg1[%16] : memref<16xi32, #tpu.memory_space<smem>>
    %18 = arith.index_cast %17 : i32 to index
    %c0_3 = arith.constant 0 : index
    %19 = vector.load %arg3[%18, %c0_3] : memref<64x128xf32, #tpu.memory_space<vmem>>, vector<1x128xf32>
    %20 = arith.index_cast %c2_i32 : i32 to index
    %c0_4 = arith.constant 0 : index
    %21 = vector.load %arg5[%20, %c0_4] : memref<8x128xf32, #tpu.memory_space<vmem>>, vector<1x128xf32>
    tpu.vector_store %arg5[%20, %c0_4], %19 {strides = array<i32>} : memref<8x128xf32, #tpu.memory_space<vmem>>, vector<1x128xf32>,
    %c3_i32 = arith.constant 3 : i32
    %22 = arith.addi %0, %c3_i32 : i32
    %23 = arith.index_cast %22 : i32 to index
    %24 = memref.load %arg1[%23] : memref<16xi32, #tpu.memory_space<smem>>
    %25 = arith.index_cast %24 : i32 to index
    %c0_5 = arith.constant 0 : index
    %26 = vector.load %arg3[%25, %c0_5] : memref<64x128xf32, #tpu.memory_space<vmem>>, vector<1x128xf32>
    %27 = arith.index_cast %c3_i32 : i32 to index
    %c0_6 = arith.constant 0 : index
    %28 = vector.load %arg5[%27, %c0_6] : memref<8x128xf32, #tpu.memory_space<vmem>>, vector<1x128xf32>
    tpu.vector_store %arg5[%27, %c0_6], %26 {strides = array<i32>} : memref<8x128xf32, #tpu.memory_space<vmem>>, vector<1x128xf32>,
    %c4_i32 = arith.constant 4 : i32
    %29 = arith.addi %0, %c4_i32 : i32
    %30 = arith.index_cast %29 : i32 to index
    %31 = memref.load %arg1[%30] : memref<16xi32, #tpu.memory_space<smem>>
    %32 = arith.index_cast %31 : i32 to index
    %c0_7 = arith.constant 0 : index
    %33 = vector.load %arg3[%32, %c0_7] : memref<64x128xf32, #tpu.memory_space<vmem>>, vector<1x128xf32>
    %34 = arith.index_cast %c4_i32 : i32 to index
    %c0_8 = arith.constant 0 : index
    %35 = vector.load %arg5[%34, %c0_8] : memref<8x128xf32, #tpu.memory_space<vmem>>, vector<1x128xf32>
    tpu.vector_store %arg5[%34, %c0_8], %33 {strides = array<i32>} : memref<8x128xf32, #tpu.memory_space<vmem>>, vector<1x128xf32>,
    %c5_i32 = arith.constant 5 : i32
    %36 = arith.addi %0, %c5_i32 : i32
    %37 = arith.index_cast %36 : i32 to index
    %38 = memref.load %arg1[%37] : memref<16xi32, #tpu.memory_space<smem>>
    %39 = arith.index_cast %38 : i32 to index
    %c0_9 = arith.constant 0 : index
    %40 = vector.load %arg3[%39, %c0_9] : memref<64x128xf32, #tpu.memory_space<vmem>>, vector<1x128xf32>
    %41 = arith.index_cast %c5_i32 : i32 to index
    %c0_10 = arith.constant 0 : index
    %42 = vector.load %arg5[%41, %c0_10] : memref<8x128xf32, #tpu.memory_space<vmem>>, vector<1x128xf32>
    tpu.vector_store %arg5[%41, %c0_10], %40 {strides = array<i32>} : memref<8x128xf32, #tpu.memory_space<vmem>>, vector<1x128xf32>,
    %c6_i32 = arith.constant 6 : i32
    %43 = arith.addi %0, %c6_i32 : i32
    %44 = arith.index_cast %43 : i32 to index
    %45 = memref.load %arg1[%44] : memref<16xi32, #tpu.memory_space<smem>>
    %46 = arith.index_cast %45 : i32 to index
    %c0_11 = arith.constant 0 : index
    %47 = vector.load %arg3[%46, %c0_11] : memref<64x128xf32, #tpu.memory_space<vmem>>, vector<1x128xf32>
    %48 = arith.index_cast %c6_i32 : i32 to index
    %c0_12 = arith.constant 0 : index
    %49 = vector.load %arg5[%48, %c0_12] : memref<8x128xf32, #tpu.memory_space<vmem>>, vector<1x128xf32>
    tpu.vector_store %arg5[%48, %c0_12], %47 {strides = array<i32>} : memref<8x128xf32, #tpu.memory_space<vmem>>, vector<1x128xf32>,
    %c7_i32 = arith.constant 7 : i32
    %50 = arith.addi %0, %c7_i32 : i32
    %51 = arith.index_cast %50 : i32 to index
    %52 = memref.load %arg1[%51] : memref<16xi32, #tpu.memory_space<smem>>
    %53 = arith.index_cast %52 : i32 to index
    %c0_13 = arith.constant 0 : index
    %54 = vector.load %arg3[%53, %c0_13] : memref<64x128xf32, #tpu.memory_space<vmem>>, vector<1x128xf32>
    %55 = arith.index_cast %c7_i32 : i32 to index
    %c0_14 = arith.constant 0 : index
    %56 = vector.load %arg5[%55, %c0_14] : memref<8x128xf32, #tpu.memory_space<vmem>>, vector<1x128xf32>
    tpu.vector_store %arg5[%55, %c0_14], %54 {strides = array<i32>} : memref<8x128xf32, #tpu.memory_space<vmem>>, vector<1x128xf32>,
    %c8_i32_15 = arith.constant 8 : i32
    %c0_16 = arith.constant 0 : index
    %c0_17 = arith.constant 0 : index
    %57 = vector.load %arg5[%c0_16, %c0_17] : memref<8x128xf32, #tpu.memory_space<vmem>>, vector<8x128xf32>
    %c0_18 = arith.constant 0 : index
    %58 = memref.load %arg2[%c0_18] : memref<5xf32, #tpu.memory_space<smem>>
    %c1 = arith.constant 1 : index
    %59 = memref.load %arg2[%c1] : memref<5xf32, #tpu.memory_space<smem>>
    %c2 = arith.constant 2 : index
    %60 = memref.load %arg2[%c2] : memref<5xf32, #tpu.memory_space<smem>>
    %c3 = arith.constant 3 : index
    %61 = memref.load %arg2[%c3] : memref<5xf32, #tpu.memory_space<smem>>
    %c4 = arith.constant 4 : index
    %62 = memref.load %arg2[%c4] : memref<5xf32, #tpu.memory_space<smem>>
    %63 = vector.broadcast %58 : f32 to vector<8x128xf32>
    %64 = arith.mulf %57, %63 : vector<8x128xf32>
    %65 = vector.broadcast %60 : f32 to vector<8x128xf32>
    %66 = arith.addf %64, %65 : vector<8x128xf32>
    %67 = math.roundeven %66 : vector<8x128xf32>
    %cst = arith.constant 0.000000e+00 : f32
    %cst_19 = arith.constant 2.550000e+02 : f32
    %68 = vector.broadcast %cst : f32 to vector<8x128xf32>
    %69 = arith.maximumf %68, %67 : vector<8x128xf32>
    %70 = vector.broadcast %cst_19 : f32 to vector<8x128xf32>
    %71 = arith.minimumf %70, %69 : vector<8x128xf32>
    %72 = vector.broadcast %60 : f32 to vector<8x128xf32>
    %73 = arith.subf %71, %72 : vector<8x128xf32>
    %74 = vector.broadcast %59 : f32 to vector<8x128xf32>
    %75 = arith.mulf %73, %74 : vector<8x128xf32>
    %76 = arith.subf %75, %57 : vector<8x128xf32>
    %77 = vector.broadcast %61 : f32 to vector<8x128xf32>
    %78 = arith.maximumf %77, %57 : vector<8x128xf32>
    %79 = vector.broadcast %62 : f32 to vector<8x128xf32>
    %80 = arith.minimumf %79, %78 : vector<8x128xf32>
    %81 = arith.addf %80, %76 : vector<8x128xf32>
    %c0_20 = arith.constant 0 : index
    %c0_21 = arith.constant 0 : index
    %82 = vector.load %arg4[%c0_20, %c0_21] : memref<8x128xf32, #tpu.memory_space<vmem>>, vector<8x128xf32>
    tpu.vector_store %arg4[%c0_20, %c0_21], %81 {strides = array<i32>} : memref<8x128xf32, #tpu.memory_space<vmem>>, vector<8x128xf32>,
    return
  }
  func.func @transform_0(%arg0: i32, %arg1: memref<16xi32, #tpu.memory_space<smem>>) -> i32 {
    %c0_i32 = arith.constant 0 : i32
    %c0_i32_0 = arith.constant 0 : i32
    return %c0_i32 : i32
  }
  func.func @transform_1(%arg0: i32, %arg1: memref<16xi32, #tpu.memory_space<smem>>) -> (i32, i32) {
    %c0_i32 = arith.constant 0 : i32
    %c0_i32_0 = arith.constant 0 : i32
    %c0_i32_1 = arith.constant 0 : i32
    return %c0_i32, %c0_i32_0 : i32, i32
  }
  func.func @transform_2(%arg0: i32, %arg1: memref<16xi32, #tpu.memory_space<smem>>) -> (i32, i32) {
    %c0_i32 = arith.constant 0 : i32
    %c0_i32_0 = arith.constant 0 : i32
    return %arg0, %c0_i32 : i32, i32
  }
}

</mosaic_0001>

<llo_original>
// kernel: tpu_custom_call.1
$region0: #{tpu_custom_call.1}
  #allocation0 [shape = 'u32[]', space=smem, size = 0x4, offset = 0x4, fixed_abs, tag = 'smem constant byte address 0x4 - core index']
  #allocation1 [shape = 'u32[144,128]{1,0:T(1,128)}', space=vmem, size = 0x12000, scoped, tag = 'internal scratch']
  #allocation2 [shape = 'f32[8,128]{1,0:T(8,128)}', space=vmem, size = 0x1000, scoped, tag = 'scratch operand']
  #allocation3 [shape = 's32[1]{0}', space=sflag, size = 0x4, scoped, tag = 'scoped memory for tpu_custom_call.1']
  #allocation4 [shape = 'u8[512]{0}', space=smem, size = 0x200, scoped, tag = 'prefetched SMEM operand 0']
  %s0 = inlined_call_operand.hbm [shape: s32[16], index: 0, kind: input, shape index: {}]
  %s1 = inlined_call_operand.vmem [shape: f32[5], index: 1, kind: input, shape index: {}]
  %s2 = inlined_call_operand.hbm [shape: f32[64,128], index: 2, kind: input, shape index: {}]
  %s3 = inlined_call_operand.hbm [shape: f32[16,128], index: 3, kind: output, shape index: {}]
  %s4 = sld [smem:[#allocation0]]
  $region49: #{tpu_custom_call.1} parent=0
    _
  %s6 = ssub.s32 1, %s4
  %s7 = scalar_select 0, %s6, %s4
  %9 = dma.hbm_to_smem %s0, 16, [#allocation4], [#allocation3]
  %10 = dma.done [#allocation3], 16
  %11 = sfence
  $region1: #{tpu_custom_call.1} parent=0
    #allocation5 [shape = 'u8[512]{0}', space=smem, size = 0x200, scoped, tag = 'input window, operand 1, single buffered']
    #allocation6 [shape = 's32[2]{0}', space=sflag, size = 0x8, scoped, tag = 'scoped memory for tpu_custom_call.1']
    #allocation7 [shape = 's32[2]{0}', space=sflag, size = 0x8, scoped, tag = 'scoped memory for tpu_custom_call.1']
    #allocation8 [shape = 's32[2]{0}', space=sflag, size = 0x8, scoped, tag = 'scoped memory for tpu_custom_call.1']
    #allocation9 [shape = 'u8[32768]{0}', space=vmem, size = 0x8000, scoped, tag = 'input window, operand 2, single buffered']
    #allocation10 [shape = 'u8[8192]{0}', space=vmem, size = 0x2000, scoped, tag = 'output window, operand 0']
    %12 = vsyncpa [#allocation8], 0
    %13 = vsyncpa [#allocation6], 0
    %14 = vsyncpa [#allocation7], 0
    %s15 = scalar_lea.sflag [#allocation7], 1
    %16 = vsyncpa %s15, 0
    loop: start=0, step=1, limit=4
    $region2: #{tpu_custom_call.1} parent=1 // loop_pre_header
      _
    $region3: #{tpu_custom_call.1} parent=1 // loop_header
      %s18 = sphi 0, %s22
      %p19 = scmp.ge.s32.totalorder %s18, 4
      %s26 = sphi 0, %s26
      %s28 = sphi 0, %s26
      %s29 = sphi 0, %s28
      %s43 = sphi 0, %s29
      %s47 = sphi 0, %s47
      %s49 = sphi 0, %s47
      %s50 = sphi 0, %s49
      %s64 = sphi 0, %s50
      %s70 = sphi 0, %s72
      %s73 = sphi 0, %s70
      %s74 = sphi 0, %s73
      %s90 = sphi 0, %s74
    $region4: #{tpu_custom_call.1} parent=1 // loop_header_branch
      %21 = sbr.rel (%p19) target = $region8
    $region5: #{tpu_custom_call.1} parent=1 // loop_body
      %s23 = ssub.s32 %s18, 1
      %s24 = ssub.s32 %s18, 2
      %s25 = sadd.s32 %s18, 1
      %s27 = sadd.s32 %s26, 1
      %p30 = scmp.eq.s32.totalorder %s18, 1
      %p31 = scmp.ne.s32.totalorder %s26, %s28
      %p32 = scmp.eq.s32.totalorder %s18, 0
      %p33 = por %p31, %p32
      %p34 = scmp.ne.s32.totalorder %s26, %s28
      %p35 = scmp.eq.s32.totalorder %s23, 1
      %p36 = por %p34, %p35
      %p37 = scmp.ne.s32.totalorder %s28, %s29
      %p38 = scmp.eq.s32.totalorder %s23, 0
      %p39 = por %p37, %p38
      %p40 = scmp.ne.s32.totalorder %s28, %s29
      %p41 = scmp.eq.s32.totalorder %s24, 1
      %p42 = por %p40, %p41
      %p44 = scmp.ne.s32.totalorder %s29, %s43
      %p45 = scmp.eq.s32.totalorder %s24, 0
      %p46 = por %p44, %p45
      %s48 = sadd.s32 %s47, 1
      %p51 = scmp.eq.s32.totalorder %s18, 1
      %p52 = scmp.ne.s32.totalorder %s47, %s49
      %p53 = scmp.eq.s32.totalorder %s18, 0
      %p54 = por %p52, %p53
      %p55 = scmp.ne.s32.totalorder %s47, %s49
      %p56 = scmp.eq.s32.totalorder %s23, 1
      %p57 = por %p55, %p56
      %p58 = scmp.ne.s32.totalorder %s49, %s50
      %p59 = scmp.eq.s32.totalorder %s23, 0
      %p60 = por %p58, %p59
      %p61 = scmp.ne.s32.totalorder %s49, %s50
      %p62 = scmp.eq.s32.totalorder %s24, 1
      %p63 = por %p61, %p62
      %p65 = scmp.ne.s32.totalorder %s50, %s64
      %p66 = scmp.eq.s32.totalorder %s24, 0
      %p67 = por %p65, %p66
      %s68 = ssub.s32 %s18, %s25
      %p69 = scmp.eq.s32.totalorder %s68, 0
      %s71 = sadd.s32 %s70, 1
      %s72 = scalar_select %p69, %s70, %s71
      %p75 = pneg %p69
      %p76 = scmp.eq.s32.totalorder %s18, 1
      %p77 = por %p75, %p76
      %p78 = scmp.ne.s32.totalorder %s70, %s73
      %p79 = scmp.eq.s32.totalorder %s18, 0
      %p80 = por %p78, %p79
      %p81 = scmp.ne.s32.totalorder %s70, %s73
      %p82 = scmp.eq.s32.totalorder %s23, 1
      %p83 = por %p81, %p82
      %p84 = scmp.ne.s32.totalorder %s73, %s74
      %p85 = scmp.eq.s32.totalorder %s23, 0
      %p86 = por %p84, %p85
      %p87 = scmp.ne.s32.totalorder %s73, %s74
      %p88 = scmp.eq.s32.totalorder %s24, 1
      %p89 = por %p87, %p88
      %p91 = scmp.ne.s32.totalorder %s74, %s90
      %p92 = scmp.eq.s32.totalorder %s24, 0
      %p93 = por %p91, %p92
      %p94 = scmp.le.s32.totalorder 1, %s18
      %p95 = scmp.lt.s32.totalorder %s18, 3
      %p96 = pnand %p94, %p95
      %p97 = pneg %p96
      // Predicated region
      $region9: #{tpu_custom_call.1} parent=5 // pred_check
        _
      $region10: #{tpu_custom_call.1} parent=5 // pred_check_branch
        %99 = sbr.rel (%p96) target = $region12
      $region11: #{tpu_custom_call.1} parent=5 // pred_region
        %s100 = ssub.s32 %s18, 1
        // Predicated region
        $region13: #{tpu_custom_call.1} parent=11 // pred_check
          %p101 = pneg %p39
        $region14: #{tpu_custom_call.1} parent=11 // pred_check_branch
          %103 = sbr.rel (%p101) target = $region16
        $region15: #{tpu_custom_call.1} parent=11 // pred_region
          %s105 = ssub.s32 16, 16
          %106 = vsyncadd [#allocation8], %s105
          %s108 = sshll.u32 %s1, 4
          %s109 = int_to_ptr.vmem [resolvable:$true] %s108
          %111 = dma.vmem_to_smem %s109, 16, [#allocation5], [#allocation8]
        $region16: #{tpu_custom_call.1} parent=11 // pred_fallthru
          _
        // Predicated region
        $region17: #{tpu_custom_call.1} parent=11 // pred_check
          %p112 = pneg %p60
        $region18: #{tpu_custom_call.1} parent=11 // pred_check_branch
          %114 = sbr.rel (%p112) target = $region20
        $region19: #{tpu_custom_call.1} parent=11 // pred_region
          %s116 = ssub.s32 1024, 1024
          %117 = vsyncadd [#allocation6], %s116
          %s118 = sshll.u32 [#allocation9], 4
          %s119 = int_to_ptr.vmem [resolvable:$true] %s118
          %124 = dma.hbm_to_vmem [thread:$0]  %s2, 1024, %s119, [#allocation6], 128, 128, 8
        $region20: #{tpu_custom_call.1} parent=11 // pred_fallthru
          _
      $region12: #{tpu_custom_call.1} parent=5 // pred_fallthru
        _
      %p125 = scmp.lt.s32.totalorder %s18, 2
      // Predicated region
      $region21: #{tpu_custom_call.1} parent=5 // pred_check
        %p126 = pneg %p125
      $region22: #{tpu_custom_call.1} parent=5 // pred_check_branch
        %128 = sbr.rel (%p126) target = $region24
      $region23: #{tpu_custom_call.1} parent=5 // pred_region
        _
      $region24: #{tpu_custom_call.1} parent=5 // pred_fallthru
        _
      %p129 = scmp.le.s32.totalorder 1, %s18
      %p130 = scmp.lt.s32.totalorder %s18, 3
      %p131 = pnand %p129, %p130
      %p132 = pneg %p131
      // Predicated region
      $region25: #{tpu_custom_call.1} parent=5 // pred_check
        _
      $region26: #{tpu_custom_call.1} parent=5 // pred_check_branch
        %134 = sbr.rel (%p131) target = $region28
      $region27: #{tpu_custom_call.1} parent=5 // pred_region
        %s135 = ssub.s32 %s18, 1
        // Predicated region
        $region29: #{tpu_custom_call.1} parent=27 // pred_check
          %p136 = pneg %p39
        $region30: #{tpu_custom_call.1} parent=27 // pred_check_branch
          %138 = sbr.rel (%p136) target = $region32
        $region31: #{tpu_custom_call.1} parent=27 // pred_region
          %139 = dma.done [#allocation8], 16
        $region32: #{tpu_custom_call.1} parent=27 // pred_fallthru
          _
        // Predicated region
        $region33: #{tpu_custom_call.1} parent=27 // pred_check
          %p140 = pneg %p60
        $region34: #{tpu_custom_call.1} parent=27 // pred_check_branch
          %142 = sbr.rel (%p140) target = $region36
        $region35: #{tpu_custom_call.1} parent=27 // pred_region
          %143 = dma.done [#allocation6], 1024
        $region36: #{tpu_custom_call.1} parent=27 // pred_fallthru
          _
        %144 = sfence
        %p145 = pneg %p39
        %p146 = pneg %p36
        %p147 = pneg %p60
        %p148 = pneg %p57
        %p149 = pneg %p86
        %p150 = pneg %p83
        %s151 = sand.u32 %s73, 1
        %s152 = scalar_lea.sflag [#allocation7], %s151
        %s153 = sand.u32 %s73, 1
        %s154 = smul.addr %s153, 8
        %s155 = scalar_lea.vmem [#allocation10], %s154
        %s156 = smul.u32 %s23, 8
        %s157 = sld [smem:[#allocation4 + %s156]]
        %s158 = scalar_lea.vmem [#allocation9], %s157
        %v159 = vld [vmem:[%s158] sm:$0x1]
        %160 = vst [vmem:[#allocation2] sm:$0x1] %v159
        %s161 = sadd.s32 %s156, 1
        %s162 = sld [smem:[#allocation4 + %s161]]
        %s163 = scalar_lea.vmem [#allocation9], %s162
        %v164 = vld [vmem:[%s163] sm:$0x1]
        %165 = vst [vmem:[#allocation2 + $0x1] sm:$0x1] %v164
        %s166 = sadd.s32 %s156, 2
        %s167 = sld [smem:[#allocation4 + %s166]]
        %s168 = scalar_lea.vmem [#allocation9], %s167
        %v169 = vld [vmem:[%s168] sm:$0x1]
        %170 = vst [vmem:[#allocation2 + $0x2] sm:$0x1] %v169
        %s171 = sadd.s32 %s156, 3
        %s172 = sld [smem:[#allocation4 + %s171]]
        %s173 = scalar_lea.vmem [#allocation9], %s172
        %v174 = vld [vmem:[%s173] sm:$0x1]
        %175 = vst [vmem:[#allocation2 + $0x3] sm:$0x1] %v174
        %s176 = sadd.s32 %s156, 4
        %s177 = sld [smem:[#allocation4 + %s176]]
        %s178 = scalar_lea.vmem [#allocation9], %s177
        %v179 = vld [vmem:[%s178] sm:$0x1]
        %180 = vst [vmem:[#allocation2 + $0x4] sm:$0x1] %v179
        %s181 = sadd.s32 %s156, 5
        %s182 = sld [smem:[#allocation4 + %s181]]
        %s183 = scalar_lea.vmem [#allocation9], %s182
        %v184 = vld [vmem:[%s183] sm:$0x1]
        %185 = vst [vmem:[#allocation2 + $0x5] sm:$0x1] %v184
        %s186 = sadd.s32 %s156, 6
        %s187 = sld [smem:[#allocation4 + %s186]]
        %s188 = scalar_lea.vmem [#allocation9], %s187
        %v189 = vld [vmem:[%s188] sm:$0x1]
        %190 = vst [vmem:[#allocation2 + $0x6] sm:$0x1] %v189
        %s191 = sadd.s32 %s156, 7
        %s192 = sld [smem:[#allocation4 + %s191]]
        %s193 = scalar_lea.vmem [#allocation9], %s192
        %v194 = vld [vmem:[%s193] sm:$0x1]
        %195 = vst [vmem:[#allocation2 + $0x7] sm:$0x1] %v194
        %v196 = vld [vmem:[#allocation2] sm:$0xff]
        %s197 = sld [smem:[#allocation5]]
        %s198 = sld [smem:[#allocation5 + $0x1]]
        %s199 = sld [smem:[#allocation5 + $0x2]]
        %s200 = sld [smem:[#allocation5 + $0x3]]
        %s201 = sld [smem:[#allocation5 + $0x4]]
        %v202 = vstv %s197
        %v203 = vmul.f32 %v196, %v202
        %v204 = vstv %s199
        %v205 = vadd.f32 %v203, %v204
        %v206 = vround.ne.pseudo %v205
        %v207 = vmax.f32 %v206, 0.0
        %v208 = vmin.f32 %v207, 255.0
        %v209 = vsub.f32 %v208, %v204
        %v210 = vstv %s198
        %v211 = vmul.f32 %v209, %v210
        %v212 = vsub.f32 %v211, %v196
        %v213 = vstv %s200
        %v214 = vmax.f32 %v213, %v196
        %v215 = vstv %s201
        %v216 = vmin.f32 %v215, %v214
        %v217 = vadd.f32 %v216, %v212
        %218 = vst [vmem:[%s155] sm:$0xff] %v217
        %s219 = sand.u32 %s73, 1
        %s220 = scalar_lea.sflag [#allocation7], %s219
        %s221 = sand.u32 %s73, 1
        %s222 = smul.addr %s221, 8
        %s223 = scalar_lea.vmem [#allocation10], %s222
        // Predicated region
        $region37: #{tpu_custom_call.1} parent=27 // pred_check
          %p224 = pneg %p83
        $region38: #{tpu_custom_call.1} parent=27 // pred_check_branch
          %226 = sbr.rel (%p224) target = $region40
        $region39: #{tpu_custom_call.1} parent=27 // pred_region
          %s228 = ssub.s32 128, 128
          %229 = vsyncadd %s220, %s228
          %s230 = smul.addr %s23, 128
          %s231 = scalar_lea.hbm %s3, %s230
          %s233 = sshll.u32 %s223, 4
          %s234 = int_to_ptr.vmem [resolvable:$true] %s233
          %236 = dma.vmem_to_hbm [thread:$0]  %s234, 128, %s231, %s220
        $region40: #{tpu_custom_call.1} parent=27 // pred_fallthru
          _
      $region28: #{tpu_custom_call.1} parent=5 // pred_fallthru
        _
      %p237 = scmp.le.s32.totalorder 2, %s18
      // Predicated region
      $region41: #{tpu_custom_call.1} parent=5 // pred_check
        %p238 = pneg %p237
      $region42: #{tpu_custom_call.1} parent=5 // pred_check_branch
        %240 = sbr.rel (%p238) target = $region44
      $region43: #{tpu_custom_call.1} parent=5 // pred_region
        %s241 = ssub.s32 %s18, 2
        // Predicated region
        $region45: #{tpu_custom_call.1} parent=43 // pred_check
          %p242 = pneg %p89
        $region46: #{tpu_custom_call.1} parent=43 // pred_check_branch
          %244 = sbr.rel (%p242) target = $region48
        $region47: #{tpu_custom_call.1} parent=43 // pred_region
          %s245 = sand.u32 %s74, 1
          %s246 = scalar_lea.sflag [#allocation7], %s245
          %s247 = sand.u32 %s74, 1
          %s248 = smul.addr %s247, 8
          %s249 = scalar_lea.vmem [#allocation10], %s248
          %250 = dma.done %s246, 128
        $region48: #{tpu_custom_call.1} parent=43 // pred_fallthru
          _
      $region44: #{tpu_custom_call.1} parent=5 // pred_fallthru
        _
    $region6: #{tpu_custom_call.1} parent=1 // loop_footer
      %s22 = sadd.s32 1, %s18
    $region7: #{tpu_custom_call.1} parent=1 // loop_footer_branch
      %17 = sbr.rel target = $region3
    $region8: #{tpu_custom_call.1} parent=1 // loop_exit
      _
    %251 = vsyncpa [#allocation6], 1
    %s252 = scalar_lea.sflag [#allocation6], 1
    %253 = vsyncpa %s252, 1
    %254 = vsyncpa [#allocation7], 1
    %s255 = scalar_lea.sflag [#allocation7], 1
    %256 = vsyncpa %s255, 1
    %257 = vsyncpa [#allocation8], 1
    %s258 = scalar_lea.sflag [#allocation8], 1
    %259 = vsyncpa %s258, 1

</llo_original>
